<compile_context>
chip_gen: v7x
topology: tpu7x:2x2x1
jax: 0.10.0
libtpu: 0.0.40
codegen_flags: <defaults>
</compile_context>

<pallas_src>
import functools

import jax
import jax.numpy as jnp
from jax.experimental import pallas as pl
from jax.experimental.pallas import tpu as pltpu


NEG_INF = -1e30  # finite large-negative mask value (safe in f32)


def _pick_tile(dim, candidates):
    """Largest candidate that evenly divides `dim`, else the full dim."""
    for c in candidates:
        if dim >= c and dim % c == 0:
            return c
    return dim


# --------------------------- tiled matmul kernel -----------------------------

def _matmul_kernel(x_ref, w_ref, o_ref, acc_ref):
    @pl.when(pl.program_id(2) == 0)
    def _init():
        acc_ref[...] = jnp.zeros_like(acc_ref)

    acc_ref[...] += jnp.dot(
        x_ref[...], w_ref[...], preferred_element_type=jnp.float32
    )

    @pl.when(pl.program_id(2) == pl.num_programs(2) - 1)
    def _done():
        o_ref[...] = acc_ref[...].astype(o_ref.dtype)


def matmul(x, w):
    """x: [M, K], w: [K, N] -> [M, N], tiled + pipelined."""
    M, K = x.shape
    K2, N = w.shape
    assert K == K2
    tm = _pick_tile(M, (512, 256, 128, 64, 32, 16, 8))
    tn = _pick_tile(N, (512, 256, 128))
    tk = _pick_tile(K, (512, 256, 128))
    grid = (M // tm, N // tn, K // tk)
    return pl.pallas_call(
        _matmul_kernel,
        out_shape=jax.ShapeDtypeStruct((M, N), x.dtype),
        grid_spec=pltpu.PrefetchScalarGridSpec(
            num_scalar_prefetch=0,
            grid=grid,
            in_specs=[
                pl.BlockSpec((tm, tk), lambda i, j, k: (i, k)),
                pl.BlockSpec((tk, tn), lambda i, j, k: (k, j)),
            ],
            out_specs=pl.BlockSpec((tm, tn), lambda i, j, k: (i, j)),
            scratch_shapes=[pltpu.VMEM((tm, tn), jnp.float32)],
        ),
        compiler_params=pltpu.CompilerParams(
            dimension_semantics=("parallel", "parallel", "arbitrary")
        ),
    )(x, w)


# ---------------------- fused linear + RMSNorm kernel ------------------------

def _linear_rmsnorm_kernel(x_ref, w_ref, g_ref, o_ref, acc_ref, *, eps):
    k = pl.program_id(1)

    @pl.when(k == 0)
    def _init():
        acc_ref[...] = jnp.zeros_like(acc_ref)

    acc_ref[...] += jnp.dot(
        x_ref[...], w_ref[...], preferred_element_type=jnp.float32
    )

    @pl.when(k == pl.num_programs(1) - 1)
    def _done():
        y = acc_ref[...]
        var = jnp.mean(y * y, axis=-1, keepdims=True)
        o_ref[...] = (y * jax.lax.rsqrt(var + eps) * g_ref[...]).astype(o_ref.dtype)


def linear_rmsnorm(x, w, g, eps=1e-6):
    """Fused (x @ w) + RMSNorm over the last dim with gain g. Rows tiled."""
    M, K = x.shape
    K2, N = w.shape
    assert K == K2
    g2 = g.reshape(1, N)
    tm = _pick_tile(M, (256, 128, 64, 32, 16, 8))
    tk = _pick_tile(K, (512, 256, 128))
    grid = (M // tm, K // tk)
    return pl.pallas_call(
        functools.partial(_linear_rmsnorm_kernel, eps=eps),
        out_shape=jax.ShapeDtypeStruct((M, N), x.dtype),
        grid_spec=pltpu.PrefetchScalarGridSpec(
            num_scalar_prefetch=0,
            grid=grid,
            in_specs=[
                pl.BlockSpec((tm, tk), lambda i, k: (i, k)),
                pl.BlockSpec((tk, N), lambda i, k: (k, 0)),
                pl.BlockSpec((1, N), lambda i, k: (0, 0)),
            ],
            out_specs=pl.BlockSpec((tm, N), lambda i, k: (i, 0)),
            scratch_shapes=[pltpu.VMEM((tm, N), jnp.float32)],
        ),
        compiler_params=pltpu.CompilerParams(
            dimension_semantics=("parallel", "arbitrary")
        ),
    )(x, w, g2)


# ------------------ flash-style causal attention kernel ----------------------

def _flash_attn_kernel(q_ref, k_ref, v_ref, o_ref, m_sc, l_sc, acc_sc,
                       *, scale, tq, tkv):
    qi = pl.program_id(1)
    ki = pl.program_id(2)

    @pl.when(ki == 0)
    def _init():
        m_sc[...] = jnp.full_like(m_sc, NEG_INF)
        l_sc[...] = jnp.zeros_like(l_sc)
        acc_sc[...] = jnp.zeros_like(acc_sc)

    q_start = qi * tq
    kv_start = ki * tkv

    # Causal: KV tiles entirely above the diagonal contribute nothing -> skip.
    @pl.when(kv_start <= q_start + tq - 1)
    def _compute():
        q = q_ref[0].astype(jnp.float32) * scale          # pre-scale (O(tq*D))
        k = k_ref[0].astype(jnp.float32)
        s = jax.lax.dot_general(                          # (tq, tkv), no k.T
            q, k, (((1,), (1,)), ((), ())),
            preferred_element_type=jnp.float32,
        )
        row = q_start + jax.lax.broadcasted_iota(jnp.int32, (tq, tkv), 0)
        col = kv_start + jax.lax.broadcasted_iota(jnp.int32, (tq, tkv), 1)
        s = jnp.where(col <= row, s, NEG_INF)

        m_prev = m_sc[...]
        m_new = jnp.maximum(m_prev, jnp.max(s, axis=-1, keepdims=True))
        alpha = jnp.exp(m_prev - m_new)
        p = jnp.exp(s - m_new)
        l_sc[...] = alpha * l_sc[...] + jnp.sum(p, axis=-1, keepdims=True)
        acc_sc[...] = alpha * acc_sc[...] + jnp.dot(
            p.astype(v_ref.dtype), v_ref[0], preferred_element_type=jnp.float32
        )
        m_sc[...] = m_new

    @pl.when(ki == pl.num_programs(2) - 1)
    def _done():
        # exact normalization; pl.reciprocal(..., approx=True) is the faster
        # production option (EUP slot) at slightly looser tolerance.
        o_ref[0] = (
            acc_sc[...] * pl.reciprocal(l_sc[...], approx=False)
        ).astype(o_ref.dtype)


def causal_flash_attention(q, k, v, scale):
    """q,k: [B*H, S, Dqk], v: [B*H, S, Dv] -> [B*H, S, Dv] causal attention."""
    BH, S, Dqk = q.shape
    Dv = v.shape[-1]
    tq = _pick_tile(S, (256, 128, 64, 32, 16, 8))
    tkv = _pick_tile(S, (256, 128, 64, 32, 16, 8))
    grid = (BH, S // tq, S // tkv)
    kernel = functools.partial(_flash_attn_kernel, scale=scale, tq=tq, tkv=tkv)
    return pl.pallas_call(
        kernel,
        out_shape=jax.ShapeDtypeStruct((BH, S, Dv), q.dtype),
        grid_spec=pltpu.PrefetchScalarGridSpec(
            num_scalar_prefetch=0,
            grid=grid,
            in_specs=[
                pl.BlockSpec((1, tq, Dqk), lambda b, i, j: (b, i, 0)),
                pl.BlockSpec((1, tkv, Dqk), lambda b, i, j: (b, j, 0)),
                pl.BlockSpec((1, tkv, Dv), lambda b, i, j: (b, j, 0)),
            ],
            out_specs=pl.BlockSpec((1, tq, Dv), lambda b, i, j: (b, i, 0)),
            scratch_shapes=[
                pltpu.VMEM((tq, 1), jnp.float32),    # running max m
                pltpu.VMEM((tq, 1), jnp.float32),    # running denom l
                pltpu.VMEM((tq, Dv), jnp.float32),   # output accumulator
            ],
        ),
        compiler_params=pltpu.CompilerParams(
            dimension_semantics=("parallel", "parallel", "arbitrary")
        ),
    )(q, k, v)


# ------------------------------ RoPE (glue) ----------------------------------
# TODO(synk): fuse RoPE into the attention / projection kernel (VPU/XLU-free
# slots) instead of a standalone JAX elementwise pass.

def rope_cos_sin(seq_len, rot_dim, theta=10000.0):
    half = rot_dim // 2
    inv_freq = theta ** (-(jnp.arange(half, dtype=jnp.float32) / half))
    angles = jnp.arange(seq_len, dtype=jnp.float32)[:, None] * inv_freq[None, :]
    return jnp.cos(angles), jnp.sin(angles)       # each (S, rot_dim//2)


def apply_rope_real(q, k, cos, sin):
    """q: (B,H,S,Dr), k: (B,1,S,Dr); pairs (x[2i], x[2i+1]) rotated by freq_cis."""
    def rot(x):
        xr = x[..., 0::2]
        xi = x[..., 1::2]
        out_r = xr * cos - xi * sin
        out_i = xr * sin + xi * cos
        return jnp.stack([out_r, out_i], axis=-1).reshape(x.shape)
    return rot(q), rot(k)


# ------------------------------ MLA forward ----------------------------------

def mla_forward(x, params, cfg):
    B, S, Dm = x.shape
    H, Dh, Dr = cfg["num_heads"], cfg["head_dim"], cfg["head_dim_decoupled_qk"]
    scale = (Dh + Dr) ** (-0.5)

    x2 = x.reshape(B * S, Dm)

    # low-rank latents + RMSNorm (fused, tiled Pallas kernels)
    c_Q = linear_rmsnorm(x2, params["W_DQ"], params["q_norm"])     # (BS, d_cq)
    c_KV = linear_rmsnorm(x2, params["W_DWK"], params["kv_norm"])  # (BS, d_ckv)

    # shared-input up-projections fused into single wide matmuls
    w_q = jnp.concatenate([params["W_UQ"], params["W_QR"]], axis=1)   # (d_cq, H*(Dh+Dr))
    w_kv = jnp.concatenate([params["W_UK"], params["W_UV"]], axis=1)  # (d_ckv, 2*H*Dh)
    q_all = matmul(c_Q, w_q)                 # (BS, H*Dh + H*Dr)
    kv_all = matmul(c_KV, w_kv)              # (BS, 2*H*Dh)
    k_R = matmul(x2, params["W_KR"])         # (BS, Dr)

    q_C = q_all[:, : H * Dh]
    q_R = q_all[:, H * Dh:]
    k_C = kv_all[:, : H * Dh]
    v = kv_all[:, H * Dh:]

    # reshape to (B, H, S, *)   (relayout glue kept in XLA)
    q_C = q_C.reshape(B, S, H, Dh).transpose(0, 2, 1, 3)
    k_C = k_C.reshape(B, S, H, Dh).transpose(0, 2, 1, 3)
    v = v.reshape(B, S, H, Dh).transpose(0, 2, 1, 3)
    q_R = q_R.reshape(B, S, H, Dr).transpose(0, 2, 1, 3)
    k_R = k_R.reshape(B, S, Dr)[:, None]     # (B, 1, S, Dr)

    cos, sin = rope_cos_sin(S, Dr)
    q_R, k_R = apply_rope_real(q_R, k_R, cos, sin)

    k = jnp.concatenate([k_C, jnp.broadcast_to(k_R, (B, H, S, Dr))], axis=-1)
    q = jnp.concatenate([q_C, q_R], axis=-1)

    # flash-style causal attention, grid over (B*H, q_tiles, kv_tiles)
    out = causal_flash_attention(
        q.reshape(B * H, S, Dh + Dr),
        k.reshape(B * H, S, Dh + Dr),
        v.reshape(B * H, S, Dh),
        scale,
    )
    out = out.reshape(B, H, S, Dh).transpose(0, 2, 1, 3).reshape(B * S, H * Dh)
    out = matmul(out, params["W_O"])         # (BS, d_model)
    # attn/res dropout p = 0.0 -> identity
    return out.reshape(B, S, Dm)


# -------------------------- pure-JAX reference --------------------------------

def mla_reference(x, params, cfg):
    B, S, Dm = x.shape
    H, Dh, Dr = cfg["num_heads"], cfg["head_dim"], cfg["head_dim_decoupled_qk"]
    scale = (Dh + Dr) ** (-0.5)

    def rms(y, g, eps=1e-6):
        return y * jax.lax.rsqrt(jnp.mean(y * y, -1, keepdims=True) + eps) * g

    c_Q = rms(x @ params["W_DQ"], params["q_norm"])
    c_KV = rms(x @ params["W_DWK"], params["kv_norm"])
    q_C = (c_Q @ params["W_UQ"]).reshape(B, S, H, Dh).transpose(0, 2, 1, 3)
    k_C = (c_KV @ params["W_UK"]).reshape(B, S, H, Dh).transpose(0, 2, 1, 3)
    v = (c_KV @ params["W_UV"]).reshape(B, S, H, Dh).transpose(0, 2, 1, 3)
    q_R = (c_Q @ params["W_QR"]).reshape(B, S, H, Dr).transpose(0, 2, 1, 3)
    k_R = (x @ params["W_KR"])[:, None]
    cos, sin = rope_cos_sin(S, Dr)
    q_R, k_R = apply_rope_real(q_R, k_R, cos, sin)
    k = jnp.concatenate([k_C, jnp.broadcast_to(k_R, (B, H, S, Dr))], axis=-1)
    q = jnp.concatenate([q_C, q_R], axis=-1)
    s = jnp.einsum("bhqd,bhkd->bhqk", q, k) * scale
    causal = jnp.tril(jnp.ones((S, S), bool))
    s = jnp.where(causal, s, -jnp.inf)
    p = jax.nn.softmax(s, axis=-1)
    o = jnp.einsum("bhqk,bhkd->bhqd", p, v)
    o = o.transpose(0, 2, 1, 3).reshape(B, S, H * Dh)
    return o @ params["W_O"]


# --------------------------------- main ---------------------------------------

def init_params(key, d_model, num_heads, head_dim, head_dim_r, d_ckv, d_cq):
    ks = jax.random.split(key, 8)

    def lin(k, din, dout):
        return jax.random.normal(k, (din, dout), jnp.float32) / jnp.sqrt(din)

    return {
        "W_DQ": lin(ks[0], d_model, d_cq),
        "W_UQ": lin(ks[1], d_cq, head_dim * num_heads),
        "W_DWK": lin(ks[2], d_model, d_ckv),
        "W_UK": lin(ks[3], d_ckv, head_dim * num_heads),
        "W_UV": lin(ks[4], d_ckv, head_dim * num_heads),
        "W_QR": lin(ks[5], d_cq, head_dim_r * num_heads),
        "W_KR": lin(ks[6], d_model, head_dim_r),
        "W_O": lin(ks[7], head_dim * num_heads, d_model),
        "q_norm": jnp.ones((d_cq,), jnp.float32),
        "kv_norm": jnp.ones((d_ckv,), jnp.float32),
    }


if __name__ == "__main__":
    cfg = {
        "d_model": 32,
        "num_heads": 2,
        "head_dim": 16,
        "head_dim_decoupled_qk": 8,
        "d_ckv": 32,
        "d_cq": 32,
        "attention_dropout": 0.0,  # dropout disabled -> deterministic identity
    }
    B, S = 2, 8

    key = jax.random.PRNGKey(0)
    kx, kp = jax.random.split(key)
    x = jax.random.normal(kx, (B, S, cfg["d_model"]), jnp.float32)
    params = init_params(
        kp, cfg["d_model"], cfg["num_heads"], cfg["head_dim"],
        cfg["head_dim_decoupled_qk"], cfg["d_ckv"], cfg["d_cq"],
    )

    out = jax.block_until_ready(mla_forward(x, params, cfg))
    ref = jax.block_until_ready(mla_reference(x, params, cfg))

    assert out.shape == (B, S, cfg["d_model"])
    assert jnp.allclose(out, ref, atol=1e-4, rtol=1e-4), (
        float(jnp.max(jnp.abs(out - ref)))
    )
    print("KERNEL_OK")
</pallas_src>

<mosaic_0001>
module attributes {stable_mosaic.version = 11 : i64} {
  func.func @_linear_rmsnorm_kernel(%arg0: i32, %arg1: i32, %arg2: memref<16x32xf32, #tpu.memory_space<vmem>>, %arg3: memref<32x32xf32, #tpu.memory_space<vmem>>, %arg4: memref<1x32xf32, #tpu.memory_space<vmem>>, %arg5: memref<16x32xf32, #tpu.memory_space<vmem>>, %arg6: memref<16x32xf32, #tpu.memory_space<vmem>>) attributes {dimension_semantics = [#tpu.dimension_semantics<parallel>, #tpu.dimension_semantics<arbitrary>], iteration_bounds = array<i64: 1, 1>, scalar_prefetch = 0 : i64, scratch_operands = 1 : i64, tpu.core_type = #tpu.core_type<tc>, window_params = [{transform_indices = @transform_0, window_bounds = array<i64: 16, 32>}, {transform_indices = @transform_1, window_bounds = array<i64: 32, 32>}, {pipeline_mode = #tpu.pipeline_mode<synchronous>, transform_indices = @transform_2, window_bounds = array<i64: 1, 32>}, {transform_indices = @transform_3, window_bounds = array<i64: 16, 32>}]} {
    %c0_i32 = arith.constant 0 : i32
    %0 = arith.cmpi eq, %arg1, %c0_i32 : i32
    %1 = arith.extui %0 : i1 to i32
    %c0_i32_0 = arith.constant 0 : i32
    %2 = arith.cmpi ne, %1, %c0_i32_0 : i32
    scf.if %2 {
      %cst_10 = arith.constant 0.000000e+00 : f32
      %12 = vector.broadcast %cst_10 : f32 to vector<16x32xf32>
      %c0_11 = arith.constant 0 : index
      %c0_12 = arith.constant 0 : index
      %13 = vector.load %arg6[%c0_11, %c0_12] : memref<16x32xf32, #tpu.memory_space<vmem>>, vector<16x32xf32>
      tpu.vector_store %arg6[%c0_11, %c0_12], %12 {strides = array<i32>} : memref<16x32xf32, #tpu.memory_space<vmem>>, vector<16x32xf32>,
    } else {
    }
    %c0 = arith.constant 0 : index
    %c0_1 = arith.constant 0 : index
    %3 = vector.load %arg6[%c0, %c0_1] : memref<16x32xf32, #tpu.memory_space<vmem>>, vector<16x32xf32>
    %c0_2 = arith.constant 0 : index
    %c0_3 = arith.constant 0 : index
    %4 = vector.load %arg2[%c0_2, %c0_3] : memref<16x32xf32, #tpu.memory_space<vmem>>, vector<16x32xf32>
    %c0_4 = arith.constant 0 : index
    %c0_5 = arith.constant 0 : index
    %5 = vector.load %arg3[%c0_4, %c0_5] : memref<32x32xf32, #tpu.memory_space<vmem>>, vector<32x32xf32>
    %cst = arith.constant dense<0.000000e+00> : vector<16x32xf32>
    %6 = tpu.matmul %4, %5, %cst {dimension_numbers = #tpu.dot_dimension_numbers<[1], [0], [0], [1], [0, 0, 1, 1], [], []>} : vector<16x32xf32>, vector<32x32xf32>, vector<16x32xf32> -> vector<16x32xf32>
    %7 = arith.addf %3, %6 : vector<16x32xf32>
    %c0_6 = arith.constant 0 : index
    %c0_7 = arith.constant 0 : index
    %8 = vector.load %arg6[%c0_6, %c0_7] : memref<16x32xf32, #tpu.memory_space<vmem>>, vector<16x32xf32>
    tpu.vector_store %arg6[%c0_6, %c0_7], %7 {strides = array<i32>} : memref<16x32xf32, #tpu.memory_space<vmem>>, vector<16x32xf32>,
    %c0_i32_8 = arith.constant 0 : i32
    %9 = arith.cmpi eq, %arg1, %c0_i32_8 : i32
    %10 = arith.extui %9 : i1 to i32
    %c0_i32_9 = arith.constant 0 : i32
    %11 = arith.cmpi ne, %10, %c0_i32_9 : i32
    scf.if %11 {
      %c0_10 = arith.constant 0 : index
      %c0_11 = arith.constant 0 : index
      %12 = vector.load %arg6[%c0_10, %c0_11] : memref<16x32xf32, #tpu.memory_space<vmem>>, vector<16x32xf32>
      %13 = arith.mulf %12, %12 : vector<16x32xf32>
      %cst_12 = arith.constant dense<0.000000e+00> : vector<16xf32>
      %14 = vector.multi_reduction <add>, %13, %cst_12 [1] : vector<16x32xf32> to vector<16xf32>
      %15 = vector.shape_cast %14 : vector<16xf32> to vector<16x1xf32>
      %cst_13 = arith.constant 3.200000e+01 : f32
      %16 = vector.broadcast %cst_13 : f32 to vector<16x1xf32>
      %17 = arith.divf %15, %16 : vector<16x1xf32>
      %cst_14 = arith.constant 9.99999997E-7 : f32
      %18 = vector.broadcast %cst_14 : f32 to vector<16x1xf32>
      %19 = arith.addf %17, %18 : vector<16x1xf32>
      %20 = math.rsqrt %19 : vector<16x1xf32>
      %21 = vector.broadcast %20 : vector<16x1xf32> to vector<16x32xf32>
      %22 = arith.mulf %12, %21 : vector<16x32xf32>
      %c0_15 = arith.constant 0 : index
      %c0_16 = arith.constant 0 : index
      %23 = vector.load %arg4[%c0_15, %c0_16] : memref<1x32xf32, #tpu.memory_space<vmem>>, vector<1x32xf32>
      %24 = vector.broadcast %23 : vector<1x32xf32> to vector<16x32xf32>
      %25 = arith.mulf %22, %24 : vector<16x32xf32>
      %c0_17 = arith.constant 0 : index
      %c0_18 = arith.constant 0 : index
      %26 = vector.load %arg5[%c0_17, %c0_18] : memref<16x32xf32, #tpu.memory_space<vmem>>, vector<16x32xf32>
      tpu.vector_store %arg5[%c0_17, %c0_18], %25 {strides = array<i32>} : memref<16x32xf32, #tpu.memory_space<vmem>>, vector<16x32xf32>,
    } else {
    }
    return
  }
  func.func @transform_0(%arg0: i32, %arg1: i32) -> (i32, i32) {
    %c0_i32 = arith.constant 0 : i32
    return %arg0, %arg1 : i32, i32
  }
  func.func @transform_1(%arg0: i32, %arg1: i32) -> (i32, i32) {
    %c0_i32 = arith.constant 0 : i32
    %c0_i32_0 = arith.constant 0 : i32
    return %arg1, %c0_i32 : i32, i32
  }
  func.func @transform_2(%arg0: i32, %arg1: i32) -> (i32, i32) {
    %c0_i32 = arith.constant 0 : i32
    %c0_i32_0 = arith.constant 0 : i32
    %c0_i32_1 = arith.constant 0 : i32
    return %c0_i32, %c0_i32_0 : i32, i32
  }
  func.func @transform_3(%arg0: i32, %arg1: i32) -> (i32, i32) {
    %c0_i32 = arith.constant 0 : i32
    %c0_i32_0 = arith.constant 0 : i32
    return %arg0, %c0_i32 : i32, i32
  }
}

</mosaic_0001>

<llo_original>
// kernel: tpu_custom_call.1
$region0: #{tpu_custom_call.1}
  #allocation0 [shape = 'u32[]', space=smem, size = 0x4, offset = 0x4, fixed_abs, tag = 'smem constant byte address 0x4 - core index']
  #allocation1 [shape = 'u32[144,128]{1,0:T(1,128)}', space=vmem, size = 0x12000, scoped, tag = 'internal scratch']
  #allocation2 [shape = 'f32[16,32]{1,0:T(8,128)}', space=vmem, size = 0x2000, scoped, tag = 'scratch operand']
  %s0 = inlined_call_operand.hbm [shape: f32[16,32], index: 0, kind: input, shape index: {}]
  %s1 = inlined_call_operand.hbm [shape: f32[32,32], index: 1, kind: input, shape index: {}]
  %s2 = inlined_call_operand.vmem [shape: f32[1,32], index: 2, kind: input, shape index: {}]
  %s3 = inlined_call_operand.hbm [shape: f32[16,32], index: 3, kind: output, shape index: {}]
  %s4 = sld [smem:[#allocation0]]
  $region38: #{tpu_custom_call.1} parent=0
    _
  %s6 = ssub.s32 1, %s4
  %s7 = scalar_select 0, %s6, %s4
  $region1: #{tpu_custom_call.1} parent=0
    #allocation3 [shape = 'u8[8192]{0}', space=vmem, size = 0x2000, scoped, tag = 'input window, operand 0, single buffered']
    #allocation4 [shape = 's32[1]{0}', space=sflag, size = 0x4, scoped, tag = 'scoped memory for tpu_custom_call.1']
    #allocation5 [shape = 's32[1]{0}', space=sflag, size = 0x4, scoped, tag = 'scoped memory for tpu_custom_call.1']
    #allocation6 [shape = 'u8[16384]{0}', space=vmem, size = 0x4000, scoped, tag = 'input window, operand 1, single buffered']
    #allocation7 [shape = 's32[1]{0}', space=sflag, size = 0x4, scoped, tag = 'scoped memory for tpu_custom_call.1']
    #allocation8 [shape = 'u8[8192]{0}', space=vmem, size = 0x2000, scoped, tag = 'output window, operand 0, single buffered']
    %8 = vsyncpa [#allocation4], 0
    %9 = vsyncpa [#allocation7], 0
    %10 = vsyncpa [#allocation5], 0
    // Predicated region
    $region2: #{tpu_custom_call.1} parent=1 // pred_check
      _
    $region3: #{tpu_custom_call.1} parent=1 // pred_check_branch
      %12 = sbr.rel (0) target = $region5
    $region4: #{tpu_custom_call.1} parent=1 // pred_region
      %s14 = ssub.s32 256, 256
      %15 = vsyncadd [#allocation4], %s14
      %s16 = sshll.u32 [#allocation3], 4
      %s17 = int_to_ptr.vmem [resolvable:$true] %s16
      %22 = dma.hbm_to_vmem [thread:$0]  %s0, 256, %s17, [#allocation4], 128, 128, 8
    $region5: #{tpu_custom_call.1} parent=1 // pred_fallthru
      _
    // Predicated region
    $region6: #{tpu_custom_call.1} parent=1 // pred_check
      _
    $region7: #{tpu_custom_call.1} parent=1 // pred_check_branch
      %24 = sbr.rel (0) target = $region9
    $region8: #{tpu_custom_call.1} parent=1 // pred_region
      %s26 = ssub.s32 512, 512
      %27 = vsyncadd [#allocation7], %s26
      %s28 = sshll.u32 [#allocation6], 4
      %s29 = int_to_ptr.vmem [resolvable:$true] %s28
      %34 = dma.hbm_to_vmem [thread:$0]  %s1, 512, %s29, [#allocation7], 128, 128, 8
    $region9: #{tpu_custom_call.1} parent=1 // pred_fallthru
      _
    // Predicated region
    $region10: #{tpu_custom_call.1} parent=1 // pred_check
      _
    $region11: #{tpu_custom_call.1} parent=1 // pred_check_branch
      %36 = sbr.rel (0) target = $region13
    $region12: #{tpu_custom_call.1} parent=1 // pred_region
      _
    $region13: #{tpu_custom_call.1} parent=1 // pred_fallthru
      _
    // Predicated region
    $region14: #{tpu_custom_call.1} parent=1 // pred_check
      _
    $region15: #{tpu_custom_call.1} parent=1 // pred_check_branch
      %38 = sbr.rel (0) target = $region17
    $region16: #{tpu_custom_call.1} parent=1 // pred_region
      %39 = dma.done [#allocation4], 256
    $region17: #{tpu_custom_call.1} parent=1 // pred_fallthru
      _
    // Predicated region
    $region18: #{tpu_custom_call.1} parent=1 // pred_check
      _
    $region19: #{tpu_custom_call.1} parent=1 // pred_check_branch
      %41 = sbr.rel (0) target = $region21
    $region20: #{tpu_custom_call.1} parent=1 // pred_region
      %42 = dma.done [#allocation7], 512
    $region21: #{tpu_custom_call.1} parent=1 // pred_fallthru
      _
    %p43 = scmp.eq.s32.totalorder 0, 0
    // Predicated region
    $region22: #{tpu_custom_call.1} parent=1 // pred_check
      %p44 = pneg %p43
    $region23: #{tpu_custom_call.1} parent=1 // pred_check_branch
      %46 = sbr.rel (%p44) target = $region25
    $region24: #{tpu_custom_call.1} parent=1 // pred_region
      %vm47 = vcmask 261120
      %48 = vst.msk [vmem:[#allocation2] sm:$0xff] %vm47, 0.0
      %49 = vst.msk [vmem:[#allocation2 + $0x8] sm:$0xff] %vm47, 0.0
    $region25: #{tpu_custom_call.1} parent=1 // pred_fallthru
      _
    %v50 = vld [vmem:[#allocation2] sm:$0xff]
    %v51 = vld [vmem:[#allocation2 + $0x8] sm:$0xff]
    %v52 = vld [vmem:[#allocation3] sm:$0xff]
    %v53 = vld [vmem:[#allocation3 + $0x8] sm:$0xff]
    %v54 = vld [vmem:[#allocation6] sm:$0xff]
    %v55 = vld [vmem:[#allocation6 + $0x8] sm:$0xff]
    %v56 = vld [vmem:[#allocation6 + $0x10] sm:$0xff]
    %v57 = vld [vmem:[#allocation6 + $0x18] sm:$0xff]
    %vm58 = vcmask 261120
    %v60 = vsel %vm58, %v52, 0
    %v63 = vsel %vm58, %v53, 0
    %65 = vmatprep.subr.mxu0 0.0
    %66 = vmatpush1.msra.mxu0 %v54
    %67 = vmatprep.subr.mxu0 0.0
    %68 = vmatpush1.msra.mxu0 %v55
    %69 = vmatprep.subr.mxu0 0.0
    %70 = vmatpush1.msra.mxu0 %v56
    %71 = vmatprep.subr.mxu0 0.0
    %72 = vmatpush1.msra.mxu0 %v57
    %73 = vmatprep.subr.mxu0 0.0
    %74 = vmatpush1.msra.mxu0 0.0
    %75 = vmatprep.subr.mxu0 0.0
    %76 = vmatpush1.msra.mxu0 0.0
    %77 = vmatprep.subr.mxu0 0.0
    %78 = vmatpush1.msra.mxu0 0.0
    %79 = vmatprep.subr.mxu0 0.0
    %80 = vmatpush1.msra.mxu0 0.0
    %81 = vmatprep.subr.mxu0 0.0
    %82 = vmatpush1.msra.mxu0 0.0
    %83 = vmatprep.subr.mxu0 0.0
    %84 = vmatpush1.msra.mxu0 0.0
    %85 = vmatprep.subr.mxu0 0.0
    %86 = vmatpush1.msra.mxu0 0.0
    %87 = vmatprep.subr.mxu0 0.0
    %88 = vmatpush1.msra.mxu0 0.0
    %89 = vmatprep.subr.mxu0 0.0
    %90 = vmatpush1.msra.mxu0 0.0
    %91 = vmatprep.subr.mxu0 0.0
    %92 = vmatpush1.msra.mxu0 0.0
    %93 = vmatprep.subr.mxu0 0.0
    %94 = vmatpush1.msra.mxu0 0.0
    %95 = vmatprep.subr.mxu0 0.0
    %96 = vmatpush1.msra.mxu0 0.0
    %97 = vmatprep.subr.mxu0 0.0
    %98 = vmatpush1.msra.mxu0 0.0
    %99 = vmatprep.subr.mxu0 0.0
    %100 = vmatpush1.msra.mxu0 0.0
    %101 = vmatprep.subr.mxu0 0.0
    %102 = vmatpush1.msra.mxu0 0.0
    %103 = vmatprep.subr.mxu0 0.0
    %104 = vmatpush1.msra.mxu0 0.0
    %105 = vmatprep.subr.mxu0 0.0
    %106 = vmatpush1.msra.mxu0 0.0
    %107 = vmatprep.subr.mxu0 0.0
    %108 = vmatpush1.msra.mxu0 0.0
    %109 = vmatprep.subr.mxu0 0.0
    %110 = vmatpush1.msra.mxu0 0.0
    %111 = vmatprep.subr.mxu0 0.0
    %112 = vmatpush1.msra.mxu0 0.0
    %113 = vmatprep.subr.mxu0 0.0
    %114 = vmatpush1.msra.mxu0 0.0
    %115 = vmatprep.subr.mxu0 0.0
    %116 = vmatpush1.msra.mxu0 0.0
    %117 = vmatprep.subr.mxu0 0.0
    %118 = vmatpush1.msra.mxu0 0.0
    %119 = vmatprep.subr.mxu0 0.0
    %120 = vmatpush1.msra.mxu0 0.0
    %121 = vmatprep.subr.mxu0 0.0
    %122 = vmatpush1.msra.mxu0 0.0
    %123 = vmatprep.subr.mxu0 0.0
    %124 = vmatpush1.msra.mxu0 0.0
    %125 = vmatprep.subr.mxu0 0.0
    %126 = vmatpush1.msra.mxu0 0.0
    %127 = vmatprep.subr.mxu0 0.0
    %128 = vmatpush1.msra.mxu0 0.0
    %129 = vmatprep.mubr.f32.mxu0 0.0
    %130 = vmatmul.mubr.f32.gmra.mrb[0].mxu0 %v60
    %v131 = vpop.f32.mrb[0].mxu0
    %v132 = vadd.f32 0.0, %v131
    %v133 = vpop.f32.mrb[0].mxu0
    %134 = vmatprep.mubr.f32.mxu0 0.0
    %135 = vmatmul.mubr.f32.gmra.mrb[0].mxu0 %v63
    %v136 = vpop.f32.mrb[0].mxu0
    %v137 = vadd.f32 0.0, %v136
    %v138 = vpop.f32.mrb[0].mxu0
    %139 = vdwg.mxu0
    %v140 = vadd.f32 %v50, %v132
    %v141 = vadd.f32 %v51, %v137
    %142 = vst.msk [vmem:[#allocation2] sm:$0xff] %vm58, %v140
    %143 = vst.msk [vmem:[#allocation2 + $0x8] sm:$0xff] %vm58, %v141
    // Predicated region
    $region26: #{tpu_custom_call.1} parent=1 // pred_check
      %p144 = pneg %p43
    $region27: #{tpu_custom_call.1} parent=1 // pred_check_branch
      %146 = sbr.rel (%p144) target = $region29
    $region28: #{tpu_custom_call.1} parent=1 // pred_region
      %v147 = vld [vmem:[#allocation2] sm:$0xff]
      %v148 = vld [vmem:[#allocation2 + $0x8] sm:$0xff]
      %v149 = vmul.f32 %v147, %v147
      %v150 = vmul.f32 %v148, %v148
      %v151 = vsel %vm58, %v149, 0.0
      %152 = vadd.xlane.f32.xlu0 %v151
      %v153 = vpop.xlane.xlu0 %152
      %v154 = vsel %vm58, %v150, 0.0
      %155 = vadd.xlane.f32.xlu0 %v154
      %v156 = vpop.xlane.xlu0 %155
      %v157 = vrcp.pop 32.0
      %v158 = vmul.f32 %v153, %v157
      %v159 = vmul.f32 %v156, %v157
      %v160 = vadd.f32 %v158, 1e-06
      %v161 = vadd.f32 %v159, 1e-06
      %v162 = vrsqrt.pop %v160
      %v163 = vrsqrt.pop %v161
      %v164 = vmul.f32 %v147, %v162
      %v165 = vmul.f32 %v148, %v163
      %v166 = vld [vmem:[%s2] sm:$0x1]
      %v168 = vlaneseq
      %v169 = vshrl.u32 %v168, 7
      %v170 = vsub.s32 0, %v169
      %v171 = vrot.slane %v166, %v170
      %v173 = vmul.f32 %v164, %v171
      %v174 = vmul.f32 %v165, %v171
      %175 = vst.msk [vmem:[#allocation8] sm:$0xff] %vm58, %v173
      %176 = vst.msk [vmem:[#allocation8 + $0x8] sm:$0xff] %vm58, %v174
    $region29: #{tpu_custom_call.1} parent=1 // pred_fallthru
      _
    // Predicated region
    $region30: #{tpu_custom_call.1} parent=1 // pred_check
      _
    $region31: #{tpu_custom_call.1} parent=1 // pred_check_branch
      %178 = sbr.rel (0) target = $region33
    $region32: #{tpu_custom_call.1} parent=1 // pred_region
      %s180 = ssub.s32 256, 256
      %181 = vsyncadd [#allocation5], %s180
      %s182 = sshll.u32 [#allocation8], 4
      %s183 = int_to_ptr.vmem [resolvable:$true] %s182
      %188 = dma.vmem_to_hbm [thread:$0]  %s183, 256, %s3, [#allocation5], 128, 128, 8
    $region33: #{tpu_custom_call.1} parent=1 // pred_fallthru
      _
    // Predicated region
    $region34: #{tpu_custom_call.1} parent=1 // pred_check
      _
    $region35: #{tpu_custom_call.1} parent=1 // pred_check_branch
      %190 = sbr.rel (0) target = $region37
    $region36: #{tpu_custom_call.1} parent=1 // pred_region
      %191 = dma.done [#allocation5], 256
    $region37: #{tpu_custom_call.1} parent=1 // pred_fallthru
      _
    %192 = vsyncpa [#allocation4], 1
    %193 = vsyncpa [#allocation7], 1
    %194 = vsyncpa [#allocation5], 1

</llo_original>
